<compile_context>
chip_gen: v6e
topology: v6e:2x2x1
jax: 0.10.0
libtpu: 0.0.40
codegen_flags: <defaults>
</compile_context>

<pallas_src>
import jax
import jax.numpy as jnp
import numpy as np
from jax.experimental import pallas as pl
from jax.experimental.pallas import tpu as pltpu


def _gin_fma_kernel(x_ref, scale_ref, shift_ref, out_ref):
    # x_ref:     (TB, TN)  slab of the flattened, padded (B_pad, N_pad) input
    # scale_ref: (1,  TN)  precomputed exp(clamp(log_scale)) tiled along C*K
    # shift_ref: (1,  TN)  shift tiled along C*K
    # out_ref:   (TB, TN)
    out_ref[...] = scale_ref[...] * x_ref[...] + shift_ref[...]


def _round_up(v, m):
    return ((v + m - 1) // m) * m


def _largest_divisor_tile(dim, align, cap):
    """Largest multiple of `align` that divides `dim` and is <= min(cap, dim).

    `dim` must already be a multiple of `align` (we pad in the wrapper)."""
    assert dim % align == 0
    best = align
    d = align
    cap = min(cap, dim)
    while d <= cap:
        if dim % d == 0:
            best = d
        d += align
    return best


# Per-buffer block budget (x block == out block).  4 MiB * (2 x-bufs + 2 out-bufs)
# + tiny param blocks ~= 16-18 MiB pipelined, well under the 48 MiB scoped limit below
# and under v7x's 64 MiB physical VMEM.
_BLOCK_BUDGET_BYTES = 4 << 20
_MAX_LANE_TILE = 16384
_VMEM_LIMIT_BYTES = 48 << 20


def group_instance_norm(x, log_scale, shift, group_len, donate_x=False):
    """Pallas forward of GroupInstanceNorm.

    x:         (B, C, K), K % group_len == 0
    log_scale: (C, group_len)  (features=C case)  or  (group_len,)  (features=None case)
    shift:     same shape as log_scale
    donate_x:  if True, alias the (flattened, padded) input buffer into the output
               (caller must not reuse x afterwards).
    Returns (outputs, logabsdet) matching the torch module.
    """
    B, C, K = x.shape
    g = group_len
    assert K % g == 0, "K must be divisible by group_len"
    reps = K // g

    # logabsdet = sum over the *original* parameter (matches torch.sum(self.log_scale)).
    logabsdet = jnp.sum(log_scale)

    # Broadcast features=None params to per-channel form.
    if log_scale.ndim == 1:
        log_scale2 = jnp.broadcast_to(log_scale[None, :], (C, g))
        shift2 = jnp.broadcast_to(shift[None, :], (C, g))
    else:
        log_scale2 = log_scale
        shift2 = shift

    # Hoist exp(clamp(..)) out of the kernel: done once on the tiny (C, g) array.
    scale2 = jnp.exp(jnp.minimum(log_scale2, 1e10)).astype(x.dtype)
    shift2 = shift2.astype(x.dtype)

    # Flatten to a lane-dense (B, C*K) slab; tile the length-g pattern along K.
    N = C * K
    x_flat = x.reshape(B, N)
    scale_flat = jnp.tile(scale2, (1, reps)).reshape(1, N)   # (1, C*K)
    shift_flat = jnp.tile(shift2, (1, reps)).reshape(1, N)   # (1, C*K)

    # dtype-dependent sublane alignment (f32: 8, bf16: 16, int8/fp8: 32).
    itemsize = jnp.dtype(x.dtype).itemsize
    sublane = {4: 8, 2: 16, 1: 32}.get(itemsize, 8)

    # Pad to (sublane, 128) multiples so every block is aligned and stores are
    # unmasked full-lane vst; slice the padding back off after the kernel.
    B_pad = _round_up(B, sublane)
    N_pad = _round_up(N, 128)
    if B_pad != B or N_pad != N:
        x_flat = jnp.pad(x_flat, ((0, B_pad - B), (0, N_pad - N)))
    if N_pad != N:
        scale_flat = jnp.pad(scale_flat, ((0, 0), (0, N_pad - N)))
        shift_flat = jnp.pad(shift_flat, ((0, 0), (0, N_pad - N)))

    # Tile sizing: lane-dense blocks up to _MAX_LANE_TILE lanes, then grow the sublane
    # dim until the ~4 MiB per-buffer budget is reached.
    TN = _largest_divisor_tile(N_pad, 128, _MAX_LANE_TILE)
    tb_cap = max(sublane, _BLOCK_BUDGET_BYTES // (TN * itemsize))
    TB = _largest_divisor_tile(B_pad, sublane, tb_cap)

    # Grid: N tiles OUTER, B tiles INNER -> the (1, TN) scale/shift blocks keep the same
    # block index across the whole inner loop and are not re-DMA'd every step.
    grid = (N_pad // TN, B_pad // TB)

    kwargs = {}
    if donate_x:
        kwargs["input_output_aliases"] = {0: 0}

    out_flat = pl.pallas_call(
        _gin_fma_kernel,
        out_shape=jax.ShapeDtypeStruct((B_pad, N_pad), x.dtype),
        grid_spec=pltpu.PrefetchScalarGridSpec(
            num_scalar_prefetch=0,
            grid=grid,
            in_specs=[
                pl.BlockSpec((TB, TN), lambda j, i: (i, j)),   # x slab
                pl.BlockSpec((1, TN), lambda j, i: (0, j)),    # precomputed scale
                pl.BlockSpec((1, TN), lambda j, i: (0, j)),    # shift
            ],
            out_specs=pl.BlockSpec((TB, TN), lambda j, i: (i, j)),
        ),
        compiler_params=pltpu.CompilerParams(
            dimension_semantics=("parallel", "parallel"),
            vmem_limit_bytes=_VMEM_LIMIT_BYTES,
        ),
        **kwargs,
    )(x_flat, scale_flat, shift_flat)

    out = out_flat[:B, :N].reshape(B, C, K)
    return out, logabsdet


def _reference(x, log_scale, shift, group_len):
    """Pure-JAX reference mirroring the torch forward."""
    B, C, K = x.shape
    g = group_len
    lad = jnp.sum(log_scale)
    if log_scale.ndim == 1:
        log_scale = jnp.broadcast_to(log_scale[None, :], (C, g))
        shift = jnp.broadcast_to(shift[None, :], (C, g))
    scale = jnp.exp(jnp.minimum(log_scale, 1e10))          # (C, g)
    xg = x.reshape(B, C, K // g, g)
    out = scale[None, :, None, :] * xg + shift[None, :, None, :]
    return out.reshape(B, C, K), lad


if __name__ == "__main__":
    # Small shapes consistent with the module: (B, L, K) = (B, C, K), K % group_len == 0.
    B, C, K, group_len = 2, 4, 20, 5

    key = jax.random.PRNGKey(0)
    kx, kls, ksh, kls1, ksh1 = jax.random.split(key, 5)
    x = jax.random.normal(kx, (B, C, K), dtype=jnp.float32)

    # --- features=C case: params of shape (C, group_len) ---
    log_scale = 0.1 * jax.random.normal(kls, (C, group_len), dtype=jnp.float32)
    shift = 0.1 * jax.random.normal(ksh, (C, group_len), dtype=jnp.float32)

    out, lad = group_instance_norm(x, log_scale, shift, group_len)
    out = jax.block_until_ready(out)
    lad = jax.block_until_ready(lad)

    ref_out, ref_lad = _reference(x, log_scale, shift, group_len)
    np.testing.assert_allclose(np.asarray(out), np.asarray(ref_out), rtol=1e-5, atol=1e-5)
    np.testing.assert_allclose(np.asarray(lad), np.asarray(ref_lad), rtol=1e-5, atol=1e-5)

    # --- features=None case: params of shape (group_len,) ---
    log_scale1 = 0.1 * jax.random.normal(kls1, (group_len,), dtype=jnp.float32)
    shift1 = 0.1 * jax.random.normal(ksh1, (group_len,), dtype=jnp.float32)

    out1, lad1 = group_instance_norm(x, log_scale1, shift1, group_len)
    out1 = jax.block_until_ready(out1)
    lad1 = jax.block_until_ready(lad1)

    ref_out1, ref_lad1 = _reference(x, log_scale1, shift1, group_len)
    np.testing.assert_allclose(np.asarray(out1), np.asarray(ref_out1), rtol=1e-5, atol=1e-5)
    np.testing.assert_allclose(np.asarray(lad1), np.asarray(ref_lad1), rtol=1e-5, atol=1e-5)

    print("KERNEL_OK")
</pallas_src>

<mosaic_0001>
module attributes {stable_mosaic.version = 11 : i64} {
  func.func @_gin_fma_kernel(%arg0: i32, %arg1: i32, %arg2: memref<8x128xf32, #tpu.memory_space<vmem>>, %arg3: memref<1x128xf32, #tpu.memory_space<vmem>>, %arg4: memref<1x128xf32, #tpu.memory_space<vmem>>, %arg5: memref<8x128xf32, #tpu.memory_space<vmem>>) attributes {dimension_semantics = [#tpu.dimension_semantics<parallel>, #tpu.dimension_semantics<parallel>], iteration_bounds = array<i64: 1, 1>, scalar_prefetch = 0 : i64, scratch_operands = 0 : i64, tpu.core_type = #tpu.core_type<tc>, window_params = [{transform_indices = @transform_0, window_bounds = array<i64: 8, 128>}, {transform_indices = @transform_1, window_bounds = array<i64: 1, 128>}, {transform_indices = @transform_2, window_bounds = array<i64: 1, 128>}, {transform_indices = @transform_3, window_bounds = array<i64: 8, 128>}]} {
    %c0 = arith.constant 0 : index
    %c0_0 = arith.constant 0 : index
    %0 = vector.load %arg3[%c0, %c0_0] : memref<1x128xf32, #tpu.memory_space<vmem>>, vector<1x128xf32>
    %c0_1 = arith.constant 0 : index
    %c0_2 = arith.constant 0 : index
    %1 = vector.load %arg2[%c0_1, %c0_2] : memref<8x128xf32, #tpu.memory_space<vmem>>, vector<8x128xf32>
    %2 = vector.broadcast %0 : vector<1x128xf32> to vector<8x128xf32>
    %3 = arith.mulf %2, %1 : vector<8x128xf32>
    %c0_3 = arith.constant 0 : index
    %c0_4 = arith.constant 0 : index
    %4 = vector.load %arg4[%c0_3, %c0_4] : memref<1x128xf32, #tpu.memory_space<vmem>>, vector<1x128xf32>
    %5 = vector.broadcast %4 : vector<1x128xf32> to vector<8x128xf32>
    %6 = arith.addf %3, %5 : vector<8x128xf32>
    %c0_5 = arith.constant 0 : index
    %c0_6 = arith.constant 0 : index
    %7 = vector.load %arg5[%c0_5, %c0_6] : memref<8x128xf32, #tpu.memory_space<vmem>>, vector<8x128xf32>
    tpu.vector_store %arg5[%c0_5, %c0_6], %6 {strides = array<i32>} : memref<8x128xf32, #tpu.memory_space<vmem>>, vector<8x128xf32>,
    return
  }
  func.func @transform_0(%arg0: i32, %arg1: i32) -> (i32, i32) {
    %c0_i32 = arith.constant 0 : i32
    return %arg1, %arg0 : i32, i32
  }
  func.func @transform_1(%arg0: i32, %arg1: i32) -> (i32, i32) {
    %c0_i32 = arith.constant 0 : i32
    %c0_i32_0 = arith.constant 0 : i32
    return %c0_i32, %arg0 : i32, i32
  }
  func.func @transform_2(%arg0: i32, %arg1: i32) -> (i32, i32) {
    %c0_i32 = arith.constant 0 : i32
    %c0_i32_0 = arith.constant 0 : i32
    return %c0_i32, %arg0 : i32, i32
  }
  func.func @transform_3(%arg0: i32, %arg1: i32) -> (i32, i32) {
    %c0_i32 = arith.constant 0 : i32
    return %arg1, %arg0 : i32, i32
  }
}

</mosaic_0001>

<llo_original>
// kernel: tpu_custom_call.1
$region0: #{tpu_custom_call.1}
  #allocation0 [shape = 'u32[]', space=smem, size = 0x4, offset = 0x4, fixed_abs, tag = 'smem constant byte address 0x4 - core index']
  #allocation1 [shape = 'u32[144,128]{1,0:T(1,128)}', space=vmem, size = 0x12000, scoped, tag = 'internal scratch']
  %s0 = inlined_call_operand.hbm [shape: f32[8,128], index: 0, kind: input, shape index: {}]
  %s1 = inlined_call_operand.vmem [shape: f32[1,128], index: 1, kind: input, shape index: {}]
  %s2 = inlined_call_operand.vmem [shape: f32[1,128], index: 2, kind: input, shape index: {}]
  %s3 = inlined_call_operand.hbm [shape: f32[8,128], index: 3, kind: output, shape index: {}]
  %s4 = sld [smem:[#allocation0]]
  $region26: #{tpu_custom_call.1} parent=0
    _
  %s6 = ssub.s32 1, %s4
  %s7 = scalar_select 0, %s6, %s4
  $region1: #{tpu_custom_call.1} parent=0
    #allocation2 [shape = 'u8[4096]{0}', space=vmem, size = 0x1000, scoped, tag = 'input window, operand 0, single buffered']
    #allocation3 [shape = 's32[1]{0}', space=sflag, size = 0x4, scoped, tag = 'scoped memory for tpu_custom_call.1']
    #allocation4 [shape = 's32[1]{0}', space=sflag, size = 0x4, scoped, tag = 'scoped memory for tpu_custom_call.1']
    #allocation5 [shape = 'u8[4096]{0}', space=vmem, size = 0x1000, scoped, tag = 'output window, operand 0, single buffered']
    %8 = vsyncpa [#allocation3], 0
    %9 = vsyncpa [#allocation4], 0
    // Predicated region
    $region2: #{tpu_custom_call.1} parent=1 // pred_check
      _
    $region3: #{tpu_custom_call.1} parent=1 // pred_check_branch
      %11 = sbr.rel (0) target = $region5
    $region4: #{tpu_custom_call.1} parent=1 // pred_region
      %s13 = ssub.s32 128, 128
      %14 = vsyncadd [#allocation3], %s13
      %s16 = sshll.u32 [#allocation2], 4
      %s17 = int_to_ptr.vmem [resolvable:$true] %s16
      %19 = dma.hbm_to_vmem [thread:$0]  %s0, 128, %s17, [#allocation3]
    $region5: #{tpu_custom_call.1} parent=1 // pred_fallthru
      _
    // Predicated region
    $region6: #{tpu_custom_call.1} parent=1 // pred_check
      _
    $region7: #{tpu_custom_call.1} parent=1 // pred_check_branch
      %21 = sbr.rel (0) target = $region9
    $region8: #{tpu_custom_call.1} parent=1 // pred_region
      _
    $region9: #{tpu_custom_call.1} parent=1 // pred_fallthru
      _
    // Predicated region
    $region10: #{tpu_custom_call.1} parent=1 // pred_check
      _
    $region11: #{tpu_custom_call.1} parent=1 // pred_check_branch
      %23 = sbr.rel (0) target = $region13
    $region12: #{tpu_custom_call.1} parent=1 // pred_region
      _
    $region13: #{tpu_custom_call.1} parent=1 // pred_fallthru
      _
    // Predicated region
    $region14: #{tpu_custom_call.1} parent=1 // pred_check
      _
    $region15: #{tpu_custom_call.1} parent=1 // pred_check_branch
      %25 = sbr.rel (0) target = $region17
    $region16: #{tpu_custom_call.1} parent=1 // pred_region
      %26 = dma.done [#allocation3], 128
    $region17: #{tpu_custom_call.1} parent=1 // pred_fallthru
      _
    %v27 = vld [vmem:[%s1] sm:$0x1]
    %v28 = vld [vmem:[#allocation2] sm:$0xff]
    %v30 = vlaneseq
    %v31 = vshrl.u32 %v30, 7
    %v32 = vsub.s32 0, %v31
    %v33 = vrot.slane %v27, %v32
    %v35 = vmul.f32 %v33, %v28
    %v36 = vld [vmem:[%s2] sm:$0x1]
    %v38 = vlaneseq
    %v39 = vshrl.u32 %v38, 7
    %v40 = vsub.s32 0, %v39
    %v41 = vrot.slane %v36, %v40
    %v43 = vadd.f32 %v35, %v41
    %44 = vst [vmem:[#allocation5] sm:$0xff] %v43
    // Predicated region
    $region18: #{tpu_custom_call.1} parent=1 // pred_check
      _
    $region19: #{tpu_custom_call.1} parent=1 // pred_check_branch
      %46 = sbr.rel (0) target = $region21
    $region20: #{tpu_custom_call.1} parent=1 // pred_region
      %s48 = ssub.s32 128, 128
      %49 = vsyncadd [#allocation4], %s48
      %s51 = sshll.u32 [#allocation5], 4
      %s52 = int_to_ptr.vmem [resolvable:$true] %s51
      %54 = dma.vmem_to_hbm [thread:$0]  %s52, 128, %s3, [#allocation4]
    $region21: #{tpu_custom_call.1} parent=1 // pred_fallthru
      _
    // Predicated region
    $region22: #{tpu_custom_call.1} parent=1 // pred_check
      _
    $region23: #{tpu_custom_call.1} parent=1 // pred_check_branch
      %56 = sbr.rel (0) target = $region25
    $region24: #{tpu_custom_call.1} parent=1 // pred_region
      %57 = dma.done [#allocation4], 128
    $region25: #{tpu_custom_call.1} parent=1 // pred_fallthru
      _
    %58 = vsyncpa [#allocation3], 1
    %59 = vsyncpa [#allocation4], 1

</llo_original>
